<compile_context>
chip_gen: v7x
topology: tpu7x:2x2x1
jax: 0.10.0
libtpu: 0.0.40
codegen_flags: <defaults>
</compile_context>

<pallas_src>
import functools

import jax
import jax.numpy as jnp
from jax.experimental import pallas as pl
from jax.experimental.pallas import tpu as pltpu


def _round_up(x, m):
    return (x + m - 1) // m * m


def _vq_kernel(x_ref, e_ref, e2_ref, q_ref, sse_ref, *, n_valid, n_pad):
    x = x_ref[...]                                                   # (tm, D) native dtype
    e = e_ref[...]                                                   # (Kp, D) native dtype
    tm, d = x.shape
    k_pad = e.shape[0]

    # argmin distances only need 0.5*||e||^2 - x.e  (||x||^2 const per row, scale>0).
    xe = jax.lax.dot_general(x, e, dimension_numbers=(((1,), (1,)), ((), ())),
                             preferred_element_type=jnp.float32)     # (tm, Kp), f32 acc
    dist = e2_ref[...] - xe                                          # +inf on padded K

    # argmin over K with first-index tie-breaking (matches torch.argmin).
    lane_iota = jax.lax.broadcasted_iota(jnp.int32, (1, k_pad), 1)   # broadcast, not (tm,Kp)
    min_d = jnp.min(dist, axis=1, keepdims=True)
    inds = jnp.min(jnp.where(dist <= min_d, lane_iota, k_pad),
                   axis=1, keepdims=True)                            # (tm, 1)

    # One-hot @ codebook == gather; exact in any matmul dtype (f32 accumulate).
    one_hot = (lane_iota == inds).astype(e.dtype)                    # (tm, Kp)
    q = jnp.dot(one_hot, e, preferred_element_type=jnp.float32)      # (tm, D) f32
    q_ref[...] = q.astype(q_ref.dtype)

    # Per-block partial SSE as an aligned (8, D) tile (no cross-iteration state).
    diff = q - x.astype(jnp.float32)
    sse_ref[0] = jnp.sum((diff * diff).reshape(tm // 8, 8, d), axis=0)

    if n_valid != n_pad:  # static: only the last block can contain padded rows
        @pl.when(pl.program_id(0) == pl.num_programs(0) - 1)
        def _():
            rows = pl.program_id(0) * tm + jax.lax.broadcasted_iota(
                jnp.int32, (tm, 1), 0)
            dm = jnp.where(rows < n_valid, diff, 0.0)
            sse_ref[0] = jnp.sum((dm * dm).reshape(tm // 8, 8, d), axis=0)


def vector_quantize(latents_nchw, codebook, beta=0.25, tm=1024,
                    vmem_budget_bytes=24 * 1024 * 1024):
    """latents_nchw: (B, D, H, W); codebook: (K, D). Returns (quantized NCHW, vq_loss).

    tm is the rows-per-tile knob; it is automatically shrunk so that the per-step
    footprint (double-buffered x/q blocks + resident codebook + (tm, K_pad) f32
    intermediates) stays under vmem_budget_bytes — sized for v7x's 64 MiB/TC VMEM.
    On v5e/v6e (128 MiB VMEM) pass a larger tm / budget for fewer grid steps.
    """
    B, D, H, W = latents_nchw.shape
    K, D2 = codebook.shape
    assert D == D2

    N = B * H * W
    k_pad = _round_up(K, 128)
    in_dt = latents_nchw.dtype
    isz = jnp.dtype(in_dt).itemsize

    # Row-tile size: sublane-aligned, no larger than the (8-padded) row count, and
    # small enough that everything fits the VMEM budget (matters for large K).
    tm = max(8, min(int(tm), _round_up(N, 8)))
    tm = _round_up(tm, 8)

    def footprint(t):
        stream = 2 * t * D * isz * 2                    # x + q blocks, double-buffered
        cbook = 2 * (k_pad * D * isz + k_pad * 4)       # codebook + ||e||^2 (x2 headroom)
        interm = 4 * t * k_pad * 4                      # xe / dist / where / one_hot (f32)
        sse = 2 * 8 * D * 4
        return stream + cbook + interm + sse

    while tm > 128 and footprint(tm) > vmem_budget_bytes:
        tm = _round_up(max(tm // 2, 128), 8)

    n_pad = _round_up(N, tm)
    num_blocks = n_pad // tm
    vmem_limit = int(min(60 * 1024 * 1024,
                         max(32 * 1024 * 1024, 2 * footprint(tm))))

    # Glue: NCHW -> NHWC -> (N, D). D is NOT padded; N padded only if needed.
    # (The permute copy mirrors the torch module's own .permute().contiguous().)
    x_flat = jnp.transpose(latents_nchw, (0, 2, 3, 1)).reshape(N, D)
    if n_pad != N:
        x_in = jnp.zeros((n_pad, D), in_dt).at[:N].set(x_flat)
    else:
        x_in = x_flat

    # Codebook: single (K_pad, D) copy in the matmul dtype; halved squared norms in
    # f32 with +inf on padded entries so they never win the argmin.
    e_f32 = codebook.astype(jnp.float32)
    e2h = 0.5 * jnp.sum(e_f32 * e_f32, axis=1)
    e2h_pad = jnp.full((1, k_pad), jnp.inf, jnp.float32).at[0, :K].set(e2h)
    e_pad = jnp.zeros((k_pad, D), in_dt).at[:K].set(codebook.astype(in_dt))

    kernel = functools.partial(_vq_kernel, n_valid=N, n_pad=n_pad)

    q_pad, sse_part = pl.pallas_call(
        kernel,
        out_shape=(
            jax.ShapeDtypeStruct((n_pad, D), in_dt),
            jax.ShapeDtypeStruct((num_blocks, 8, D), jnp.float32),
        ),
        grid_spec=pltpu.PrefetchScalarGridSpec(
            num_scalar_prefetch=0,
            grid=(num_blocks,),
            in_specs=[
                pl.BlockSpec((tm, D), lambda i: (i, 0)),        # latent rows
                pl.BlockSpec((k_pad, D), lambda i: (0, 0)),     # codebook (dist + gather)
                pl.BlockSpec((1, k_pad), lambda i: (0, 0)),     # 0.5*||e||^2 (+inf pad)
            ],
            out_specs=[
                pl.BlockSpec((tm, D), lambda i: (i, 0)),        # quantized rows
                pl.BlockSpec((1, 8, D), lambda i: (i, 0, 0)),   # per-block SSE partial
            ],
        ),
        compiler_params=pltpu.CompilerParams(
            dimension_semantics=("parallel",),      # no cross-iteration state
            vmem_limit_bytes=vmem_limit,
        ),
    )(x_in, e_pad, e2h_pad)

    # vq_loss = beta*mse(q.detach(), x) + mse(q, x.detach()) == (1+beta)*mse(q, x)
    mse = jnp.sum(sse_part) / jnp.float32(N * D)
    vq_loss = ((1.0 + beta) * mse).astype(jnp.float32)

    # Straight-through estimator: forward value == quantized. Strip padding, to NCHW.
    # TODO(synk): STE/detach only affect autograd, not the forward value reproduced here.
    q_flat = q_pad[:N] if n_pad != N else q_pad
    quantized = jnp.transpose(q_flat.reshape(B, H, W, D), (0, 3, 1, 2))
    return quantized, vq_loss


if __name__ == "__main__":
    # Module config: out_channels unused in forward; embedding_dim=D=4, num_embeddings=K=8.
    B, D, H, W = 2, 4, 16, 16
    K = 8
    beta = 0.25

    key = jax.random.PRNGKey(0)
    k_lat, k_emb = jax.random.split(key)

    latents = jax.random.normal(k_lat, (B, D, H, W), dtype=jnp.float32)
    # nn.Embedding weight init: uniform(-1/K, 1/K), deterministic here.
    codebook = jax.random.uniform(
        k_emb, (K, D), dtype=jnp.float32, minval=-1.0 / K, maxval=1.0 / K
    )

    # tm=128 at this tiny demo shape so the grid has several steps (exercises index maps).
    quantized, vq_loss = vector_quantize(latents, codebook, beta=beta, tm=128)
    jax.block_until_ready((quantized, vq_loss))

    # Lightweight self-check against a pure-JAX reference.
    x_flat = jnp.transpose(latents, (0, 2, 3, 1)).reshape(-1, D)
    dist = (
        jnp.sum(x_flat**2, axis=1, keepdims=True)
        + jnp.sum(codebook**2, axis=1)[None, :]
        - 2.0 * x_flat @ codebook.T
    )
    inds = jnp.argmin(dist, axis=1)
    q_ref = codebook[inds]
    q_ref_nchw = jnp.transpose(q_ref.reshape(B, H, W, D), (0, 3, 1, 2))
    loss_ref = (1.0 + beta) * jnp.mean((q_ref - x_flat) ** 2)

    assert jnp.allclose(quantized, q_ref_nchw, atol=1e-5)
    assert jnp.allclose(vq_loss, loss_ref, atol=1e-5)

    print("KERNEL_OK")
</pallas_src>

<mosaic_0001>
module attributes {stable_mosaic.version = 11 : i64} {
  func.func @_vq_kernel(%arg0: i32, %arg1: memref<128x4xf32, #tpu.memory_space<vmem>>, %arg2: memref<128x4xf32, #tpu.memory_space<vmem>>, %arg3: memref<1x128xf32, #tpu.memory_space<vmem>>, %arg4: memref<128x4xf32, #tpu.memory_space<vmem>>, %arg5: memref<1x8x4xf32, #tpu.memory_space<vmem>>) attributes {dimension_semantics = [#tpu.dimension_semantics<parallel>], iteration_bounds = array<i64: 4>, scalar_prefetch = 0 : i64, scratch_operands = 0 : i64, tpu.core_type = #tpu.core_type<tc>, window_params = [{transform_indices = @transform_0, window_bounds = array<i64: 128, 4>}, {pipeline_mode = #tpu.pipeline_mode<synchronous>, transform_indices = @transform_1, window_bounds = array<i64: 128, 4>}, {pipeline_mode = #tpu.pipeline_mode<synchronous>, transform_indices = @transform_2, window_bounds = array<i64: 1, 128>}, {transform_indices = @transform_3, window_bounds = array<i64: 128, 4>}, {transform_indices = @transform_4, window_bounds = array<i64: 1, 8, 4>}]} {
    %c0 = arith.constant 0 : index
    %c0_0 = arith.constant 0 : index
    %0 = vector.load %arg1[%c0, %c0_0] : memref<128x4xf32, #tpu.memory_space<vmem>>, vector<128x4xf32>
    %c0_1 = arith.constant 0 : index
    %c0_2 = arith.constant 0 : index
    %1 = vector.load %arg2[%c0_1, %c0_2] : memref<128x4xf32, #tpu.memory_space<vmem>>, vector<128x4xf32>
    %cst = arith.constant dense<0.000000e+00> : vector<128x128xf32>
    %2 = tpu.matmul %0, %1, %cst {dimension_numbers = #tpu.dot_dimension_numbers<[1], [1], [0], [0], [0, 0, 1, 0], [], []>} : vector<128x4xf32>, vector<128x4xf32>, vector<128x128xf32> -> vector<128x128xf32>
    %c0_3 = arith.constant 0 : index
    %c0_4 = arith.constant 0 : index
    %3 = vector.load %arg3[%c0_3, %c0_4] : memref<1x128xf32, #tpu.memory_space<vmem>>, vector<1x128xf32>
    %4 = vector.broadcast %3 : vector<1x128xf32> to vector<128x128xf32>
    %5 = arith.subf %4, %2 : vector<128x128xf32>
    %6 = tpu.iota {dimensions = array<i32: 1>} : vector<1x128xi32>
    %cst_5 = arith.constant dense<0x7F800000> : vector<128xf32>
    %7 = vector.multi_reduction <minimumf>, %5, %cst_5 [1] : vector<128x128xf32> to vector<128xf32>
    %8 = vector.shape_cast %7 : vector<128xf32> to vector<128x1xf32>
    %9 = vector.broadcast %8 : vector<128x1xf32> to vector<128x128xf32>
    %10 = arith.cmpf ole, %5, %9 : vector<128x128xf32>
    %c128_i32 = arith.constant 128 : i32
    %11 = vector.shape_cast %6 : vector<1x128xi32> to vector<1x128xi32>
    %12 = vector.broadcast %11 : vector<1x128xi32> to vector<128x128xi32>
    %13 = vector.broadcast %c128_i32 : i32 to vector<128x128xi32>
    %14 = arith.select %10, %12, %13 : vector<128x128xi1>, vector<128x128xi32>
    %cst_6 = arith.constant dense<2147483647> : vector<128xi32>
    %15 = vector.multi_reduction <minsi>, %14, %cst_6 [1] : vector<128x128xi32> to vector<128xi32>
    %16 = vector.shape_cast %15 : vector<128xi32> to vector<128x1xi32>
    %17 = vector.broadcast %6 : vector<1x128xi32> to vector<128x128xi32>
    %18 = vector.broadcast %16 : vector<128x1xi32> to vector<128x128xi32>
    %19 = arith.cmpi eq, %17, %18 : vector<128x128xi32>
    %20 = arith.extui %19 : vector<128x128xi1> to vector<128x128xi32>
    %21 = arith.sitofp %20 : vector<128x128xi32> to vector<128x128xf32>
    %cst_7 = arith.constant dense<0.000000e+00> : vector<128x4xf32>
    %22 = tpu.matmul %21, %1, %cst_7 {dimension_numbers = #tpu.dot_dimension_numbers<[1], [0], [0], [1], [0, 0, 1, 1], [], []>} : vector<128x128xf32>, vector<128x4xf32>, vector<128x4xf32> -> vector<128x4xf32>
    %c0_8 = arith.constant 0 : index
    %c0_9 = arith.constant 0 : index
    %23 = vector.load %arg4[%c0_8, %c0_9] : memref<128x4xf32, #tpu.memory_space<vmem>>, vector<128x4xf32>
    tpu.vector_store %arg4[%c0_8, %c0_9], %22 {strides = array<i32>} : memref<128x4xf32, #tpu.memory_space<vmem>>, vector<128x4xf32>,
    %24 = arith.subf %22, %0 : vector<128x4xf32>
    %25 = arith.mulf %24, %24 : vector<128x4xf32>
    %26 = vector.shape_cast %25 : vector<128x4xf32> to vector<16x8x4xf32>
    %cst_10 = arith.constant dense<0.000000e+00> : vector<8x4xf32>
    %27 = vector.multi_reduction <add>, %26, %cst_10 [0] : vector<16x8x4xf32> to vector<8x4xf32>
    %c0_11 = arith.constant 0 : index
    %c0_12 = arith.constant 0 : index
    %c0_13 = arith.constant 0 : index
    %28 = vector.load %arg5[%c0_11, %c0_12, %c0_13] : memref<1x8x4xf32, #tpu.memory_space<vmem>>, vector<1x8x4xf32>
    %29 = vector.shape_cast %28 : vector<1x8x4xf32> to vector<8x4xf32>
    %30 = vector.shape_cast %27 : vector<8x4xf32> to vector<1x8x4xf32>
    tpu.vector_store %arg5[%c0_11, %c0_12, %c0_13], %30 {strides = array<i32>} : memref<1x8x4xf32, #tpu.memory_space<vmem>>, vector<1x8x4xf32>,
    return
  }
  func.func @transform_0(%arg0: i32) -> (i32, i32) {
    %c0_i32 = arith.constant 0 : i32
    %c0_i32_0 = arith.constant 0 : i32
    return %arg0, %c0_i32 : i32, i32
  }
  func.func @transform_1(%arg0: i32) -> (i32, i32) {
    %c0_i32 = arith.constant 0 : i32
    %c0_i32_0 = arith.constant 0 : i32
    %c0_i32_1 = arith.constant 0 : i32
    return %c0_i32, %c0_i32_0 : i32, i32
  }
  func.func @transform_2(%arg0: i32) -> (i32, i32) {
    %c0_i32 = arith.constant 0 : i32
    %c0_i32_0 = arith.constant 0 : i32
    %c0_i32_1 = arith.constant 0 : i32
    return %c0_i32, %c0_i32_0 : i32, i32
  }
  func.func @transform_3(%arg0: i32) -> (i32, i32) {
    %c0_i32 = arith.constant 0 : i32
    %c0_i32_0 = arith.constant 0 : i32
    return %arg0, %c0_i32 : i32, i32
  }
  func.func @transform_4(%arg0: i32) -> (i32, i32, i32) {
    %c0_i32 = arith.constant 0 : i32
    %c0_i32_0 = arith.constant 0 : i32
    %c0_i32_1 = arith.constant 0 : i32
    return %arg0, %c0_i32, %c0_i32_0 : i32, i32, i32
  }
}

</mosaic_0001>

<llo_original>
// kernel: tpu_custom_call.1
$region0: #{tpu_custom_call.1}
  #allocation0 [shape = 'u32[]', space=smem, size = 0x4, offset = 0x4, fixed_abs, tag = 'smem constant byte address 0x4 - core index']
  #allocation1 [shape = 'u32[144,128]{1,0:T(1,128)}', space=vmem, size = 0x12000, scoped, tag = 'internal scratch']
  %s0 = inlined_call_operand.vmem [shape: f32[512,4], index: 0, kind: input, shape index: {}]
  %s1 = inlined_call_operand.vmem [shape: f32[128,4], index: 1, kind: input, shape index: {}]
  %s2 = inlined_call_operand.vmem [shape: f32[1,128], index: 2, kind: input, shape index: {}]
  %s3 = inlined_call_operand.vmem [shape: f32[512,4], index: 3, kind: output, shape index: {0}]
  %s4 = inlined_call_operand.vmem [shape: f32[4,8,4], index: 4, kind: output, shape index: {1}]
  %5 = xla_tuple %s3, %s4
  %s6 = sld [smem:[#allocation0]]
  $region53: #{tpu_custom_call.1} parent=0
    _
  %s8 = ssub.s32 1, %s6
  %s9 = scalar_select 0, %s8, %s6
  loop: start=0, step=1, limit=6
  $region2: #{tpu_custom_call.1} parent=0 // loop_pre_header
    _
  $region3: #{tpu_custom_call.1} parent=0 // loop_header
    %s11 = sphi 0, %s15
    %p12 = scmp.ge.s32.totalorder %s11, 6
    %s21 = sphi 0, %s23
    %s24 = sphi 0, %s21
    %s25 = sphi 0, %s24
    %s41 = sphi 0, %s25
    %s45 = sphi 0, %s45
    %s47 = sphi 0, %s45
    %s48 = sphi 0, %s47
    %s62 = sphi 0, %s48
    %s66 = sphi 0, %s66
    %s68 = sphi 0, %s66
    %s69 = sphi 0, %s68
    %s83 = sphi 0, %s69
    %s89 = sphi 0, %s91
    %s92 = sphi 0, %s89
    %s93 = sphi 0, %s92
    %s109 = sphi 0, %s93
    %s115 = sphi 0, %s117
    %s118 = sphi 0, %s115
    %s119 = sphi 0, %s118
    %s135 = sphi 0, %s119
  $region4: #{tpu_custom_call.1} parent=0 // loop_header_branch
    %14 = sbr.rel (%p12) target = $region8
  $region5: #{tpu_custom_call.1} parent=0 // loop_body
    %s16 = ssub.s32 %s11, 1
    %s17 = ssub.s32 %s11, 2
    %s18 = sadd.s32 %s11, 1
    %s19 = ssub.s32 %s11, %s18
    %p20 = scmp.eq.s32.totalorder %s19, 0
    %s22 = sadd.s32 %s21, 1
    %s23 = scalar_select %p20, %s21, %s22
    %p26 = pneg %p20
    %p27 = scmp.eq.s32.totalorder %s11, 3
    %p28 = por %p26, %p27
    %p29 = scmp.ne.s32.totalorder %s21, %s24
    %p30 = scmp.eq.s32.totalorder %s11, 0
    %p31 = por %p29, %p30
    %p32 = scmp.ne.s32.totalorder %s21, %s24
    %p33 = scmp.eq.s32.totalorder %s16, 3
    %p34 = por %p32, %p33
    %p35 = scmp.ne.s32.totalorder %s24, %s25
    %p36 = scmp.eq.s32.totalorder %s16, 0
    %p37 = por %p35, %p36
    %p38 = scmp.ne.s32.totalorder %s24, %s25
    %p39 = scmp.eq.s32.totalorder %s17, 3
    %p40 = por %p38, %p39
    %p42 = scmp.ne.s32.totalorder %s25, %s41
    %p43 = scmp.eq.s32.totalorder %s17, 0
    %p44 = por %p42, %p43
    %s46 = sadd.s32 %s45, 1
    %p49 = scmp.eq.s32.totalorder %s11, 3
    %p50 = scmp.ne.s32.totalorder %s45, %s47
    %p51 = scmp.eq.s32.totalorder %s11, 0
    %p52 = por %p50, %p51
    %p53 = scmp.ne.s32.totalorder %s45, %s47
    %p54 = scmp.eq.s32.totalorder %s16, 3
    %p55 = por %p53, %p54
    %p56 = scmp.ne.s32.totalorder %s47, %s48
    %p57 = scmp.eq.s32.totalorder %s16, 0
    %p58 = por %p56, %p57
    %p59 = scmp.ne.s32.totalorder %s47, %s48
    %p60 = scmp.eq.s32.totalorder %s17, 3
    %p61 = por %p59, %p60
    %p63 = scmp.ne.s32.totalorder %s48, %s62
    %p64 = scmp.eq.s32.totalorder %s17, 0
    %p65 = por %p63, %p64
    %s67 = sadd.s32 %s66, 1
    %p70 = scmp.eq.s32.totalorder %s11, 3
    %p71 = scmp.ne.s32.totalorder %s66, %s68
    %p72 = scmp.eq.s32.totalorder %s11, 0
    %p73 = por %p71, %p72
    %p74 = scmp.ne.s32.totalorder %s66, %s68
    %p75 = scmp.eq.s32.totalorder %s16, 3
    %p76 = por %p74, %p75
    %p77 = scmp.ne.s32.totalorder %s68, %s69
    %p78 = scmp.eq.s32.totalorder %s16, 0
    %p79 = por %p77, %p78
    %p80 = scmp.ne.s32.totalorder %s68, %s69
    %p81 = scmp.eq.s32.totalorder %s17, 3
    %p82 = por %p80, %p81
    %p84 = scmp.ne.s32.totalorder %s69, %s83
    %p85 = scmp.eq.s32.totalorder %s17, 0
    %p86 = por %p84, %p85
    %s87 = ssub.s32 %s11, %s18
    %p88 = scmp.eq.s32.totalorder %s87, 0
    %s90 = sadd.s32 %s89, 1
    %s91 = scalar_select %p88, %s89, %s90
    %p94 = pneg %p88
    %p95 = scmp.eq.s32.totalorder %s11, 3
    %p96 = por %p94, %p95
    %p97 = scmp.ne.s32.totalorder %s89, %s92
    %p98 = scmp.eq.s32.totalorder %s11, 0
    %p99 = por %p97, %p98
    %p100 = scmp.ne.s32.totalorder %s89, %s92
    %p101 = scmp.eq.s32.totalorder %s16, 3
    %p102 = por %p100, %p101
    %p103 = scmp.ne.s32.totalorder %s92, %s93
    %p104 = scmp.eq.s32.totalorder %s16, 0
    %p105 = por %p103, %p104
    %p106 = scmp.ne.s32.totalorder %s92, %s93
    %p107 = scmp.eq.s32.totalorder %s17, 3
    %p108 = por %p106, %p107
    %p110 = scmp.ne.s32.totalorder %s93, %s109
    %p111 = scmp.eq.s32.totalorder %s17, 0
    %p112 = por %p110, %p111
    %s113 = ssub.s32 %s11, %s18
    %p114 = scmp.eq.s32.totalorder %s113, 0
    %s116 = sadd.s32 %s115, 1
    %s117 = scalar_select %p114, %s115, %s116
    %p120 = pneg %p114
    %p121 = scmp.eq.s32.totalorder %s11, 3
    %p122 = por %p120, %p121
    %p123 = scmp.ne.s32.totalorder %s115, %s118
    %p124 = scmp.eq.s32.totalorder %s11, 0
    %p125 = por %p123, %p124
    %p126 = scmp.ne.s32.totalorder %s115, %s118
    %p127 = scmp.eq.s32.totalorder %s16, 3
    %p128 = por %p126, %p127
    %p129 = scmp.ne.s32.totalorder %s118, %s119
    %p130 = scmp.eq.s32.totalorder %s16, 0
    %p131 = por %p129, %p130
    %p132 = scmp.ne.s32.totalorder %s118, %s119
    %p133 = scmp.eq.s32.totalorder %s17, 3
    %p134 = por %p132, %p133
    %p136 = scmp.ne.s32.totalorder %s119, %s135
    %p137 = scmp.eq.s32.totalorder %s17, 0
    %p138 = por %p136, %p137
    %p139 = scmp.le.s32.totalorder 1, %s11
    %p140 = scmp.lt.s32.totalorder %s11, 5
    %p141 = pnand %p139, %p140
    %p142 = pneg %p141
    // Predicated region
    $region9: #{tpu_custom_call.1} parent=5 // pred_check
      _
    $region10: #{tpu_custom_call.1} parent=5 // pred_check_branch
      %144 = sbr.rel (%p141) target = $region12
    $region11: #{tpu_custom_call.1} parent=5 // pred_region
      %s145 = ssub.s32 %s11, 1
      // Predicated region
      $region13: #{tpu_custom_call.1} parent=11 // pred_check
        %p146 = pneg %p58
      $region14: #{tpu_custom_call.1} parent=11 // pred_check_branch
        %148 = sbr.rel (%p146) target = $region16
      $region15: #{tpu_custom_call.1} parent=11 // pred_region
        _
      $region16: #{tpu_custom_call.1} parent=11 // pred_fallthru
        _
      // Predicated region
      $region17: #{tpu_custom_call.1} parent=11 // pred_check
        %p149 = pneg %p79
      $region18: #{tpu_custom_call.1} parent=11 // pred_check_branch
        %151 = sbr.rel (%p149) target = $region20
      $region19: #{tpu_custom_call.1} parent=11 // pred_region
        _
      $region20: #{tpu_custom_call.1} parent=11 // pred_fallthru
        _
    $region12: #{tpu_custom_call.1} parent=5 // pred_fallthru
      _
    %p152 = scmp.lt.s32.totalorder %s11, 4
    // Predicated region
    $region21: #{tpu_custom_call.1} parent=5 // pred_check
      %p153 = pneg %p152
    $region22: #{tpu_custom_call.1} parent=5 // pred_check_branch
      %155 = sbr.rel (%p153) target = $region24
    $region23: #{tpu_custom_call.1} parent=5 // pred_region
      // Predicated region
      $region25: #{tpu_custom_call.1} parent=23 // pred_check
        %p156 = pneg %p31
      $region26: #{tpu_custom_call.1} parent=23 // pred_check_branch
        %158 = sbr.rel (%p156) target = $region28
      $region27: #{tpu_custom_call.1} parent=23 // pred_region
        %s159 = smul.u32 16, %s11
        %p160 = scmp.lt.s32.totalorder %s159, 63
        %s161 = scalar_select %p160, %s159, 63
        %s162 = smul.addr %s161, 8
        %s163 = scalar_lea.vmem %s0, %s162
        %s164 = smul.u32 16, %s11
      $region28: #{tpu_custom_call.1} parent=23 // pred_fallthru
        _
    $region24: #{tpu_custom_call.1} parent=5 // pred_fallthru
      _
    %p165 = scmp.le.s32.totalorder 1, %s11
    %p166 = scmp.lt.s32.totalorder %s11, 5
    %p167 = pnand %p165, %p166
    %p168 = pneg %p167
    // Predicated region
    $region29: #{tpu_custom_call.1} parent=5 // pred_check
      _
    $region30: #{tpu_custom_call.1} parent=5 // pred_check_branch
      %170 = sbr.rel (%p167) target = $region32
    $region31: #{tpu_custom_call.1} parent=5 // pred_region
      %s171 = ssub.s32 %s11, 1
      %s172 = smul.u32 16, %s16
      %p173 = scmp.lt.s32.totalorder %s172, 63
      %s174 = scalar_select %p173, %s172, 63
      %s175 = smul.addr %s174, 8
      %s176 = scalar_lea.vmem %s0, %s175
      %p177 = pneg %p37
      %p178 = pneg %p34
      %p179 = pneg %p58
      %p180 = pneg %p55
      %p181 = pneg %p79
      %p182 = pneg %p76
      %p183 = pneg %p105
      %p184 = pneg %p102
      %s185 = smul.u32 16, %s16
      %p186 = scmp.lt.s32.totalorder %s185, 63
      %s187 = scalar_select %p186, %s185, 63
      %s188 = smul.addr %s187, 8
      %s189 = scalar_lea.vmem %s3, %s188
      %p190 = pneg %p131
      %p191 = pneg %p128
      %p192 = scmp.lt.s32.totalorder %s16, 3
      %s193 = scalar_select %p192, %s16, 3
      %s194 = smul.addr %s193, 8
      %s195 = scalar_lea.vmem %s4, %s194
      %s196 = smul.u32 16, %s16
      %p197 = scmp.lt.s32.totalorder %s196, 63
      %s198 = scalar_select %p197, %s196, 63
      %s199 = smul.addr %s198, 8
      %s200 = scalar_lea.vmem %s0, %s199
      %s201 = smul.u32 16, %s16
      %s202 = smul.u32 16, %s16
      %p203 = scmp.lt.s32.totalorder %s202, 63
      %s204 = scalar_select %p203, %s202, 63
      %s205 = smul.addr %s204, 8
      %s206 = scalar_lea.vmem %s3, %s205
      %s207 = smul.u32 16, %s16
      %p208 = scmp.lt.s32.totalorder %s16, 3
      %s209 = scalar_select %p208, %s16, 3
      %s210 = smul.addr %s209, 8
      %s211 = scalar_lea.vmem %s4, %s210
      %v212 = vld [vmem:[%s200] sm:$0xff]
      %v213 = vld [vmem:[%s200 + $0x8] sm:$0xff]
      %v214 = vld [vmem:[%s200 + $0x10] sm:$0xff]
      %v215 = vld [vmem:[%s200 + $0x18] sm:$0xff]
      %v216 = vld [vmem:[%s200 + $0x20] sm:$0xff]
      %v217 = vld [vmem:[%s200 + $0x28] sm:$0xff]
      %v218 = vld [vmem:[%s200 + $0x30] sm:$0xff]
      %v219 = vld [vmem:[%s200 + $0x38] sm:$0xff]
      %v220 = vld [vmem:[%s200 + $0x40] sm:$0xff]
      %v221 = vld [vmem:[%s200 + $0x48] sm:$0xff]
      %v222 = vld [vmem:[%s200 + $0x50] sm:$0xff]
      %v223 = vld [vmem:[%s200 + $0x58] sm:$0xff]
      %v224 = vld [vmem:[%s200 + $0x60] sm:$0xff]
      %v225 = vld [vmem:[%s200 + $0x68] sm:$0xff]
      %v226 = vld [vmem:[%s200 + $0x70] sm:$0xff]
      %v227 = vld [vmem:[%s200 + $0x78] sm:$0xff]
      %v228 = vld [vmem:[%s1] sm:$0xff]
      %v229 = vld [vmem:[%s1 + $0x8] sm:$0xff]
      %v230 = vld [vmem:[%s1 + $0x10] sm:$0xff]
      %v231 = vld [vmem:[%s1 + $0x18] sm:$0xff]
      %v232 = vld [vmem:[%s1 + $0x20] sm:$0xff]
      %v233 = vld [vmem:[%s1 + $0x28] sm:$0xff]
      %v234 = vld [vmem:[%s1 + $0x30] sm:$0xff]
      %v235 = vld [vmem:[%s1 + $0x38] sm:$0xff]
      %v236 = vld [vmem:[%s1 + $0x40] sm:$0xff]
      %v237 = vld [vmem:[%s1 + $0x48] sm:$0xff]
      %v238 = vld [vmem:[%s1 + $0x50] sm:$0xff]
      %v239 = vld [vmem:[%s1 + $0x58] sm:$0xff]
      %v240 = vld [vmem:[%s1 + $0x60] sm:$0xff]
      %v241 = vld [vmem:[%s1 + $0x68] sm:$0xff]
      %v242 = vld [vmem:[%s1 + $0x70] sm:$0xff]
      %v243 = vld [vmem:[%s1 + $0x78] sm:$0xff]
      %vm244 = vcmask 31744
      %v246 = vsel %vm244, %v212, 0
      %v249 = vsel %vm244, %v213, 0
      %v252 = vsel %vm244, %v214, 0
      %v255 = vsel %vm244, %v215, 0
      %v258 = vsel %vm244, %v216, 0
      %v261 = vsel %vm244, %v217, 0
      %v264 = vsel %vm244, %v218, 0
      %v267 = vsel %vm244, %v219, 0
      %v270 = vsel %vm244, %v220, 0
      %v273 = vsel %vm244, %v221, 0
      %v276 = vsel %vm244, %v222, 0
      %v279 = vsel %vm244, %v223, 0
      %v282 = vsel %vm244, %v224, 0
      %v285 = vsel %vm244, %v225, 0
      %v288 = vsel %vm244, %v226, 0
      %v291 = vsel %vm244, %v227, 0
      %v294 = vsel %vm244, %v228, 0
      %v297 = vsel %vm244, %v229, 0
      %v300 = vsel %vm244, %v230, 0
      %v303 = vsel %vm244, %v231, 0
      %v306 = vsel %vm244, %v232, 0
      %v309 = vsel %vm244, %v233, 0
      %v312 = vsel %vm244, %v234, 0
      %v315 = vsel %vm244, %v235, 0
      %v318 = vsel %vm244, %v236, 0
      %v321 = vsel %vm244, %v237, 0
      %v324 = vsel %vm244, %v238, 0
      %v327 = vsel %vm244, %v239, 0
      %v330 = vsel %vm244, %v240, 0
      %v333 = vsel %vm244, %v241, 0
      %v336 = vsel %vm244, %v242, 0
      %v339 = vsel %vm244, %v243, 0
      %341 = vmatprep.subr.mxu0 0.0
      %342 = vmatpush1.xpose.msra.mxu0 %v294
      %343 = vmatprep.subr.mxu0 0.0
      %344 = vmatpush1.xpose.msra.mxu0 %v297
      %345 = vmatprep.subr.mxu0 0.0
      %346 = vmatpush1.xpose.msra.mxu0 %v300
      %347 = vmatprep.subr.mxu0 0.0
      %348 = vmatpush1.xpose.msra.mxu0 %v303
      %349 = vmatprep.subr.mxu0 0.0
      %350 = vmatpush1.xpose.msra.mxu0 %v306
      %351 = vmatprep.subr.mxu0 0.0
      %352 = vmatpush1.xpose.msra.mxu0 %v309
      %353 = vmatprep.subr.mxu0 0.0
      %354 = vmatpush1.xpose.msra.mxu0 %v312
      %355 = vmatprep.subr.mxu0 0.0
      %356 = vmatpush1.xpose.msra.mxu0 %v315
      %357 = vmatprep.subr.mxu0 0.0
      %358 = vmatpush1.xpose.msra.mxu0 %v318
      %359 = vmatprep.subr.mxu0 0.0
      %360 = vmatpush1.xpose.msra.mxu0 %v321
      %361 = vmatprep.subr.mxu0 0.0
      %362 = vmatpush1.xpose.msra.mxu0 %v324
      %363 = vmatprep.subr.mxu0 0.0
      %364 = vmatpush1.xpose.msra.mxu0 %v327
      %365 = vmatprep.subr.mxu0 0.0
      %366 = vmatpush1.xpose.msra.mxu0 %v330
      %367 = vmatprep.subr.mxu0 0.0
      %368 = vmatpush1.xpose.msra.mxu0 %v333
      %369 = vmatprep.subr.mxu0 0.0
      %370 = vmatpush1.xpose.msra.mxu0 %v336
      %371 = vmatprep.subr.mxu0 0.0
      %372 = vmatpush1.xpose.msra.mxu0 %v339
      %373 = vmatprep.subr.mxu0 0.0
      %374 = vmatpush1.xpose.msra.mxu0 0.0
      %375 = vmatprep.subr.mxu0 0.0
      %376 = vmatpush1.xpose.msra.mxu0 0.0
      %377 = vmatprep.subr.mxu0 0.0
      %378 = vmatpush1.xpose.msra.mxu0 0.0
      %379 = vmatprep.subr.mxu0 0.0
      %380 = vmatpush1.xpose.msra.mxu0 0.0
      %381 = vmatprep.subr.mxu0 0.0
      %382 = vmatpush1.xpose.msra.mxu0 0.0
      %383 = vmatprep.subr.mxu0 0.0
      %384 = vmatpush1.xpose.msra.mxu0 0.0
      %385 = vmatprep.subr.mxu0 0.0
      %386 = vmatpush1.xpose.msra.mxu0 0.0
      %387 = vmatprep.subr.mxu0 0.0
      %388 = vmatpush1.xpose.msra.mxu0 0.0
      %389 = vmatprep.subr.mxu0 0.0
      %390 = vmatpush1.xpose.msra.mxu0 0.0
      %391 = vmatprep.subr.mxu0 0.0
      %392 = vmatpush1.xpose.msra.mxu0 0.0
      %393 = vmatprep.subr.mxu0 0.0
      %394 = vmatpush1.xpose.msra.mxu0 0.0
      %395 = vmatprep.subr.mxu0 0.0
      %396 = vmatpush1.xpose.msra.mxu0 0.0
      %397 = vmatprep.subr.mxu0 0.0
      %398 = vmatpush1.xpose.msra.mxu0 0.0
      %399 = vmatprep.subr.mxu0 0.0
      %400 = vmatpush1.xpose.msra.mxu0 0.0
      %401 = vmatprep.subr.mxu0 0.0
      %402 = vmatpush1.xpose.msra.mxu0 0.0
      %403 = vmatprep.subr.mxu0 0.0
      %404 = vmatpush1.xpose.msra.mxu0 0.0
      %405 = vmatprep.mubr.f32.mxu0 0.0
      %406 = vmatmul.mubr.f32.gmra.mrb[0].mxu0 %v246
      %v407 = vpop.f32.mrb[0].mxu0
      %v408 = vadd.f32 0.0, %v407
      %v409 = vpop.f32.mrb[0].mxu0
      %410 = vmatprep.mubr.f32.mxu0 0.0
      %411 = vmatmul.mubr.f32.gmra.mrb[0].mxu0 %v249
      %v412 = vpop.f32.mrb[0].mxu0
      %v413 = vadd.f32 0.0, %v412
      %v414 = vpop.f32.mrb[0].mxu0
      %415 = vmatprep.mubr.f32.mxu0 0.0
      %416 = vmatmul.mubr.f32.gmra.mrb[0].mxu0 %v252
      %v417 = vpop.f32.mrb[0].mxu0
      %v418 = vadd.f32 0.0, %v417
      %v419 = vpop.f32.mrb[0].mxu0
      %420 = vmatprep.mubr.f32.mxu0 0.0
      %421 = vmatmul.mubr.f32.gmra.mrb[0].mxu0 %v255
      %v422 = vpop.f32.mrb[0].mxu0
      %v423 = vadd.f32 0.0, %v422
      %v424 = vpop.f32.mrb[0].mxu0
      %425 = vmatprep.mubr.f32.mxu0 0.0
      %426 = vmatmul.mubr.f32.gmra.mrb[0].mxu0 %v258
      %v427 = vpop.f32.mrb[0].mxu0
      %v428 = vadd.f32 0.0, %v427
      %v429 = vpop.f32.mrb[0].mxu0
      %430 = vmatprep.mubr.f32.mxu0 0.0
      %431 = vmatmul.mubr.f32.gmra.mrb[0].mxu0 %v261
      %v432 = vpop.f32.mrb[0].mxu0
      %v433 = vadd.f32 0.0, %v432
      %v434 = vpop.f32.mrb[0].mxu0
      %435 = vmatprep.mubr.f32.mxu0 0.0
      %436 = vmatmul.mubr.f32.gmra.mrb[0].mxu0 %v264
      %v437 = vpop.f32.mrb[0].mxu0
      %v438 = vadd.f32 0.0, %v437
      %v439 = vpop.f32.mrb[0].mxu0
      %440 = vmatprep.mubr.f32.mxu0 0.0
      %441 = vmatmul.mubr.f32.gmra.mrb[0].mxu0 %v267
      %v442 = vpop.f32.mrb[0].mxu0
      %v443 = vadd.f32 0.0, %v442
      %v444 = vpop.f32.mrb[0].mxu0
      %445 = vmatprep.mubr.f32.mxu0 0.0
      %446 = vmatmul.mubr.f32.gmra.mrb[0].mxu0 %v270
      %v447 = vpop.f32.mrb[0].mxu0
      %v448 = vadd.f32 0.0, %v447
      %v449 = vpop.f32.mrb[0].mxu0
      %450 = vmatprep.mubr.f32.mxu0 0.0
      %451 = vmatmul.mubr.f32.gmra.mrb[0].mxu0 %v273
      %v452 = vpop.f32.mrb[0].mxu0
      %v453 = vadd.f32 0.0, %v452
      %v454 = vpop.f32.mrb[0].mxu0
      %455 = vmatprep.mubr.f32.mxu0 0.0
      %456 = vmatmul.mubr.f32.gmra.mrb[0].mxu0 %v276
      %v457 = vpop.f32.mrb[0].mxu0
      %v458 = vadd.f32 0.0, %v457
      %v459 = vpop.f32.mrb[0].mxu0
      %460 = vmatprep.mubr.f32.mxu0 0.0
      %461 = vmatmul.mubr.f32.gmra.mrb[0].mxu0 %v279
      %v462 = vpop.f32.mrb[0].mxu0
      %v463 = vadd.f32 0.0, %v462
      %v464 = vpop.f32.mrb[0].mxu0
      %465 = vmatprep.mubr.f32.mxu0 0.0
      %466 = vmatmul.mubr.f32.gmra.mrb[0].mxu0 %v282
      %v467 = vpop.f32.mrb[0].mxu0
      %v468 = vadd.f32 0.0, %v467
      %v469 = vpop.f32.mrb[0].mxu0
      %470 = vmatprep.mubr.f32.mxu0 0.0
      %471 = vmatmul.mubr.f32.gmra.mrb[0].mxu0 %v285
      %v472 = vpop.f32.mrb[0].mxu0
      %v473 = vadd.f32 0.0, %v472
      %v474 = vpop.f32.mrb[0].mxu0
      %475 = vmatprep.mubr.f32.mxu0 0.0
      %476 = vmatmul.mubr.f32.gmra.mrb[0].mxu0 %v288
      %v477 = vpop.f32.mrb[0].mxu0
      %v478 = vadd.f32 0.0, %v477
      %v479 = vpop.f32.mrb[0].mxu0
      %480 = vmatprep.mubr.f32.mxu0 0.0
      %481 = vmatmul.mubr.f32.gmra.mrb[0].mxu0 %v291
      %v482 = vpop.f32.mrb[0].mxu0
      %v483 = vadd.f32 0.0, %v482
      %v484 = vpop.f32.mrb[0].mxu0
      %485 = vdwg.mxu0
      %v486 = vld [vmem:[%s2] sm:$0x1]
      %v488 = vlaneseq
      %v489 = vshrl.u32 %v488, 7
      %v490 = vsub.s32 0, %v489
      %v491 = vrot.slane %v486, %v490
      %v493 = vsub.f32 %v491, %v408
      %v494 = vsub.f32 %v491, %v413
      %v495 = vsub.f32 %v491, %v418
      %v496 = vsub.f32 %v491, %v423
      %v497 = vsub.f32 %v491, %v428
      %v498 = vsub.f32 %v491, %v433
      %v499 = vsub.f32 %v491, %v438
      %v500 = vsub.f32 %v491, %v443
      %v501 = vsub.f32 %v491, %v448
      %v502 = vsub.f32 %v491, %v453
      %v503 = vsub.f32 %v491, %v458
      %v504 = vsub.f32 %v491, %v463
      %v505 = vsub.f32 %v491, %v468
      %v506 = vsub.f32 %v491, %v473
      %v507 = vsub.f32 %v491, %v478
      %v508 = vsub.f32 %v491, %v483
      %v509 = vlaneseq
      %v510 = vand.u32 %v509, 127
      %511 = vmin.xlane.f32.xlu0 %v493
      %v512 = vpop.xlane.xlu0 %511
      %513 = vmin.xlane.f32.xlu0 %v494
      %v514 = vpop.xlane.xlu0 %513
      %515 = vmin.xlane.f32.xlu0 %v495
      %v516 = vpop.xlane.xlu0 %515
      %517 = vmin.xlane.f32.xlu0 %v496
      %v518 = vpop.xlane.xlu0 %517
      %519 = vmin.xlane.f32.xlu0 %v497
      %v520 = vpop.xlane.xlu0 %519
      %521 = vmin.xlane.f32.xlu0 %v498
      %v522 = vpop.xlane.xlu0 %521
      %523 = vmin.xlane.f32.xlu0 %v499
      %v524 = vpop.xlane.xlu0 %523
      %525 = vmin.xlane.f32.xlu0 %v500
      %v526 = vpop.xlane.xlu0 %525
      %527 = vmin.xlane.f32.xlu0 %v501
      %v528 = vpop.xlane.xlu0 %527
      %529 = vmin.xlane.f32.xlu0 %v502
      %v530 = vpop.xlane.xlu0 %529
      %531 = vmin.xlane.f32.xlu0 %v503
      %v532 = vpop.xlane.xlu0 %531
      %533 = vmin.xlane.f32.xlu0 %v504
      %v534 = vpop.xlane.xlu0 %533
      %535 = vmin.xlane.f32.xlu0 %v505
      %v536 = vpop.xlane.xlu0 %535
      %537 = vmin.xlane.f32.xlu0 %v506
      %v538 = vpop.xlane.xlu0 %537
      %539 = vmin.xlane.f32.xlu0 %v507
      %v540 = vpop.xlane.xlu0 %539
      %541 = vmin.xlane.f32.xlu0 %v508
      %v542 = vpop.xlane.xlu0 %541
      %vm543 = vcmp.le.f32.partialorder %v493, %v512
      %vm544 = vcmp.le.f32.partialorder %v494, %v514
      %vm545 = vcmp.le.f32.partialorder %v495, %v516
      %vm546 = vcmp.le.f32.partialorder %v496, %v518
      %vm547 = vcmp.le.f32.partialorder %v497, %v520
      %vm548 = vcmp.le.f32.partialorder %v498, %v522
      %vm549 = vcmp.le.f32.partialorder %v499, %v524
      %vm550 = vcmp.le.f32.partialorder %v500, %v526
      %vm551 = vcmp.le.f32.partialorder %v501, %v528
      %vm552 = vcmp.le.f32.partialorder %v502, %v530
      %vm553 = vcmp.le.f32.partialorder %v503, %v532
      %vm554 = vcmp.le.f32.partialorder %v504, %v534
      %vm555 = vcmp.le.f32.partialorder %v505, %v536
      %vm556 = vcmp.le.f32.partialorder %v506, %v538
      %vm557 = vcmp.le.f32.partialorder %v507, %v540
      %vm558 = vcmp.le.f32.partialorder %v508, %v542
      %v559 = vsel %vm543, %v510, 128
      %v560 = vsel %vm544, %v510, 128
      %v561 = vsel %vm545, %v510, 128
      %v562 = vsel %vm546, %v510, 128
      %v563 = vsel %vm547, %v510, 128
      %v564 = vsel %vm548, %v510, 128
      %v565 = vsel %vm549, %v510, 128
      %v566 = vsel %vm550, %v510, 128
      %v567 = vsel %vm551, %v510, 128
      %v568 = vsel %vm552, %v510, 128
      %v569 = vsel %vm553, %v510, 128
      %v570 = vsel %vm554, %v510, 128
      %v571 = vsel %vm555, %v510, 128
      %v572 = vsel %vm556, %v510, 128
      %v573 = vsel %vm557, %v510, 128
      %v574 = vsel %vm558, %v510, 128
      %v575 = vand.u32 %v559, 65535
      %v576 = vshra.s32 %v559, 16
      %v577 = vcvt.s32.f32 %v575
      %v578 = vcvt.s32.f32 %v576
      %579 = vmin.xlane.f32.xlu0 %v578
      %v580 = vpop.xlane.xlu0 %579
      %vm581 = vcmp.eq.f32.partialorder %v578, %v580
      %v582 = vsel %vm581, %v577, inf
      %583 = vmin.xlane.f32.xlu0 %v582
      %v584 = vpop.xlane.xlu0 %583
      %v585 = vcvt.f32.s32 %v584
      %v586 = vcvt.f32.s32 %v580
      %v587 = vshll.u32 %v586, 16
      %v588 = vadd.s32 %v587, %v585
      %v589 = vand.u32 %v560, 65535
      %v590 = vshra.s32 %v560, 16
      %v591 = vcvt.s32.f32 %v589
      %v592 = vcvt.s32.f32 %v590
      %593 = vmin.xlane.f32.xlu0 %v592
      %v594 = vpop.xlane.xlu0 %593
      %vm595 = vcmp.eq.f32.partialorder %v592, %v594
      %v596 = vsel %vm595, %v591, inf
      %597 = vmin.xlane.f32.xlu0 %v596
      %v598 = vpop.xlane.xlu0 %597
      %v599 = vcvt.f32.s32 %v598
      %v600 = vcvt.f32.s32 %v594
      %v601 = vshll.u32 %v600, 16
      %v602 = vadd.s32 %v601, %v599
      %v603 = vand.u32 %v561, 65535
      %v604 = vshra.s32 %v561, 16
      %v605 = vcvt.s32.f32 %v603
      %v606 = vcvt.s32.f32 %v604
      %607 = vmin.xlane.f32.xlu0 %v606
      %v608 = vpop.xlane.xlu0 %607
      %vm609 = vcmp.eq.f32.partialorder %v606, %v608
      %v610 = vsel %vm609, %v605, inf
      %611 = vmin.xlane.f32.xlu0 %v610
      %v612 = vpop.xlane.xlu0 %611
      %v613 = vcvt.f32.s32 %v612
      %v614 = vcvt.f32.s32 %v608
      %v615 = vshll.u32 %v614, 16
      %v616 = vadd.s32 %v615, %v613
      %v617 = vand.u32 %v562, 65535
      %v618 = vshra.s32 %v562, 16
      %v619 = vcvt.s32.f32 %v617
      %v620 = vcvt.s32.f32 %v618
      %621 = vmin.xlane.f32.xlu0 %v620
      %v622 = vpop.xlane.xlu0 %621
      %vm623 = vcmp.eq.f32.partialorder %v620, %v622
      %v624 = vsel %vm623, %v619, inf
      %625 = vmin.xlane.f32.xlu0 %v624
      %v626 = vpop.xlane.xlu0 %625
      %v627 = vcvt.f32.s32 %v626
      %v628 = vcvt.f32.s32 %v622
      %v629 = vshll.u32 %v628, 16
      %v630 = vadd.s32 %v629, %v627
      %v631 = vand.u32 %v563, 65535
      %v632 = vshra.s32 %v563, 16
      %v633 = vcvt.s32.f32 %v631
      %v634 = vcvt.s32.f32 %v632
      %635 = vmin.xlane.f32.xlu0 %v634
      %v636 = vpop.xlane.xlu0 %635
      %vm637 = vcmp.eq.f32.partialorder %v634, %v636
      %v638 = vsel %vm637, %v633, inf
      %639 = vmin.xlane.f32.xlu0 %v638
      %v640 = vpop.xlane.xlu0 %639
      %v641 = vcvt.f32.s32 %v640
      %v642 = vcvt.f32.s32 %v636
      %v643 = vshll.u32 %v642, 16
      %v644 = vadd.s32 %v643, %v641
      %v645 = vand.u32 %v564, 65535
      %v646 = vshra.s32 %v564, 16
      %v647 = vcvt.s32.f32 %v645
      %v648 = vcvt.s32.f32 %v646
      %649 = vmin.xlane.f32.xlu0 %v648
      %v650 = vpop.xlane.xlu0 %649
      %vm651 = vcmp.eq.f32.partialorder %v648, %v650
      %v652 = vsel %vm651, %v647, inf
      %653 = vmin.xlane.f32.xlu0 %v652
      %v654 = vpop.xlane.xlu0 %653
      %v655 = vcvt.f32.s32 %v654
      %v656 = vcvt.f32.s32 %v650
      %v657 = vshll.u32 %v656, 16
      %v658 = vadd.s32 %v657, %v655
      %v659 = vand.u32 %v565, 65535
      %v660 = vshra.s32 %v565, 16
      %v661 = vcvt.s32.f32 %v659
      %v662 = vcvt.s32.f32 %v660
      %663 = vmin.xlane.f32.xlu0 %v662
      %v664 = vpop.xlane.xlu0 %663
      %vm665 = vcmp.eq.f32.partialorder %v662, %v664
      %v666 = vsel %vm665, %v661, inf
      %667 = vmin.xlane.f32.xlu0 %v666
      %v668 = vpop.xlane.xlu0 %667
      %v669 = vcvt.f32.s32 %v668
      %v670 = vcvt.f32.s32 %v664
      %v671 = vshll.u32 %v670, 16
      %v672 = vadd.s32 %v671, %v669
      %v673 = vand.u32 %v566, 65535
      %v674 = vshra.s32 %v566, 16
      %v675 = vcvt.s32.f32 %v673
      %v676 = vcvt.s32.f32 %v674
      %677 = vmin.xlane.f32.xlu0 %v676
      %v678 = vpop.xlane.xlu0 %677
      %vm679 = vcmp.eq.f32.partialorder %v676, %v678
      %v680 = vsel %vm679, %v675, inf
      %681 = vmin.xlane.f32.xlu0 %v680
      %v682 = vpop.xlane.xlu0 %681
      %v683 = vcvt.f32.s32 %v682
      %v684 = vcvt.f32.s32 %v678
      %v685 = vshll.u32 %v684, 16
      %v686 = vadd.s32 %v685, %v683
      %v687 = vand.u32 %v567, 65535
      %v688 = vshra.s32 %v567, 16
      %v689 = vcvt.s32.f32 %v687
      %v690 = vcvt.s32.f32 %v688
      %691 = vmin.xlane.f32.xlu0 %v690
      %v692 = vpop.xlane.xlu0 %691
      %vm693 = vcmp.eq.f32.partialorder %v690, %v692
      %v694 = vsel %vm693, %v689, inf
      %695 = vmin.xlane.f32.xlu0 %v694
      %v696 = vpop.xlane.xlu0 %695
      %v697 = vcvt.f32.s32 %v696
      %v698 = vcvt.f32.s32 %v692
      %v699 = vshll.u32 %v698, 16
      %v700 = vadd.s32 %v699, %v697
      %v701 = vand.u32 %v568, 65535
      %v702 = vshra.s32 %v568, 16
      %v703 = vcvt.s32.f32 %v701
      %v704 = vcvt.s32.f32 %v702
      %705 = vmin.xlane.f32.xlu0 %v704
      %v706 = vpop.xlane.xlu0 %705
      %vm707 = vcmp.eq.f32.partialorder %v704, %v706
      %v708 = vsel %vm707, %v703, inf
      %709 = vmin.xlane.f32.xlu0 %v708
      %v710 = vpop.xlane.xlu0 %709
      %v711 = vcvt.f32.s32 %v710
      %v712 = vcvt.f32.s32 %v706
      %v713 = vshll.u32 %v712, 16
      %v714 = vadd.s32 %v713, %v711
      %v715 = vand.u32 %v569, 65535
      %v716 = vshra.s32 %v569, 16
      %v717 = vcvt.s32.f32 %v715
      %v718 = vcvt.s32.f32 %v716
      %719 = vmin.xlane.f32.xlu0 %v718
      %v720 = vpop.xlane.xlu0 %719
      %vm721 = vcmp.eq.f32.partialorder %v718, %v720
      %v722 = vsel %vm721, %v717, inf
      %723 = vmin.xlane.f32.xlu0 %v722
      %v724 = vpop.xlane.xlu0 %723
      %v725 = vcvt.f32.s32 %v724
      %v726 = vcvt.f32.s32 %v720
      %v727 = vshll.u32 %v726, 16
      %v728 = vadd.s32 %v727, %v725
      %v729 = vand.u32 %v570, 65535
      %v730 = vshra.s32 %v570, 16
      %v731 = vcvt.s32.f32 %v729
      %v732 = vcvt.s32.f32 %v730
      %733 = vmin.xlane.f32.xlu0 %v732
      %v734 = vpop.xlane.xlu0 %733
      %vm735 = vcmp.eq.f32.partialorder %v732, %v734
      %v736 = vsel %vm735, %v731, inf
      %737 = vmin.xlane.f32.xlu0 %v736
      %v738 = vpop.xlane.xlu0 %737
      %v739 = vcvt.f32.s32 %v738
      %v740 = vcvt.f32.s32 %v734
      %v741 = vshll.u32 %v740, 16
      %v742 = vadd.s32 %v741, %v739
      %v743 = vand.u32 %v571, 65535
      %v744 = vshra.s32 %v571, 16
      %v745 = vcvt.s32.f32 %v743
      %v746 = vcvt.s32.f32 %v744
      %747 = vmin.xlane.f32.xlu0 %v746
      %v748 = vpop.xlane.xlu0 %747
      %vm749 = vcmp.eq.f32.partialorder %v746, %v748
      %v750 = vsel %vm749, %v745, inf
      %751 = vmin.xlane.f32.xlu0 %v750
      %v752 = vpop.xlane.xlu0 %751
      %v753 = vcvt.f32.s32 %v752
      %v754 = vcvt.f32.s32 %v748
      %v755 = vshll.u32 %v754, 16
      %v756 = vadd.s32 %v755, %v753
      %v757 = vand.u32 %v572, 65535
      %v758 = vshra.s32 %v572, 16
      %v759 = vcvt.s32.f32 %v757
      %v760 = vcvt.s32.f32 %v758
      %761 = vmin.xlane.f32.xlu0 %v760
      %v762 = vpop.xlane.xlu0 %761
      %vm763 = vcmp.eq.f32.partialorder %v760, %v762
      %v764 = vsel %vm763, %v759, inf
      %765 = vmin.xlane.f32.xlu0 %v764
      %v766 = vpop.xlane.xlu0 %765
      %v767 = vcvt.f32.s32 %v766
      %v768 = vcvt.f32.s32 %v762
      %v769 = vshll.u32 %v768, 16
      %v770 = vadd.s32 %v769, %v767
      %v771 = vand.u32 %v573, 65535
      %v772 = vshra.s32 %v573, 16
      %v773 = vcvt.s32.f32 %v771
      %v774 = vcvt.s32.f32 %v772
      %775 = vmin.xlane.f32.xlu0 %v774
      %v776 = vpop.xlane.xlu0 %775
      %vm777 = vcmp.eq.f32.partialorder %v774, %v776
      %v778 = vsel %vm777, %v773, inf
      %779 = vmin.xlane.f32.xlu0 %v778
      %v780 = vpop.xlane.xlu0 %779
      %v781 = vcvt.f32.s32 %v780
      %v782 = vcvt.f32.s32 %v776
      %v783 = vshll.u32 %v782, 16
      %v784 = vadd.s32 %v783, %v781
      %v785 = vand.u32 %v574, 65535
      %v786 = vshra.s32 %v574, 16
      %v787 = vcvt.s32.f32 %v785
      %v788 = vcvt.s32.f32 %v786
      %789 = vmin.xlane.f32.xlu0 %v788
      %v790 = vpop.xlane.xlu0 %789
      %vm791 = vcmp.eq.f32.partialorder %v788, %v790
      %v792 = vsel %vm791, %v787, inf
      %793 = vmin.xlane.f32.xlu0 %v792
      %v794 = vpop.xlane.xlu0 %793
      %v795 = vcvt.f32.s32 %v794
      %v796 = vcvt.f32.s32 %v790
      %v797 = vshll.u32 %v796, 16
      %v798 = vadd.s32 %v797, %v795
      %vm799 = vcmp.eq.s32.totalorder %v510, %v588
      %vm800 = vcmp.eq.s32.totalorder %v510, %v602
      %vm801 = vcmp.eq.s32.totalorder %v510, %v616
      %vm802 = vcmp.eq.s32.totalorder %v510, %v630
      %vm803 = vcmp.eq.s32.totalorder %v510, %v644
      %vm804 = vcmp.eq.s32.totalorder %v510, %v658
      %vm805 = vcmp.eq.s32.totalorder %v510, %v672
      %vm806 = vcmp.eq.s32.totalorder %v510, %v686
      %vm807 = vcmp.eq.s32.totalorder %v510, %v700
      %vm808 = vcmp.eq.s32.totalorder %v510, %v714
      %vm809 = vcmp.eq.s32.totalorder %v510, %v728
      %vm810 = vcmp.eq.s32.totalorder %v510, %v742
      %vm811 = vcmp.eq.s32.totalorder %v510, %v756
      %vm812 = vcmp.eq.s32.totalorder %v510, %v770
      %vm813 = vcmp.eq.s32.totalorder %v510, %v784
      %vm814 = vcmp.eq.s32.totalorder %v510, %v798
      %v815 = vsel %vm799, 1, 0
      %v816 = vsel %vm800, 1, 0
      %v817 = vsel %vm801, 1, 0
      %v818 = vsel %vm802, 1, 0
      %v819 = vsel %vm803, 1, 0
      %v820 = vsel %vm804, 1, 0
      %v821 = vsel %vm805, 1, 0
      %v822 = vsel %vm806, 1, 0
      %v823 = vsel %vm807, 1, 0
      %v824 = vsel %vm808, 1, 0
      %v825 = vsel %vm809, 1, 0
      %v826 = vsel %vm810, 1, 0
      %v827 = vsel %vm811, 1, 0
      %v828 = vsel %vm812, 1, 0
      %v829 = vsel %vm813, 1, 0
      %v830 = vsel %vm814, 1, 0
      %v831 = vcvt.s32.f32 %v815
      %v832 = vcvt.s32.f32 %v816
      %v833 = vcvt.s32.f32 %v817
      %v834 = vcvt.s32.f32 %v818
      %v835 = vcvt.s32.f32 %v819
      %v836 = vcvt.s32.f32 %v820
      %v837 = vcvt.s32.f32 %v821
      %v838 = vcvt.s32.f32 %v822
      %v839 = vcvt.s32.f32 %v823
      %v840 = vcvt.s32.f32 %v824
      %v841 = vcvt.s32.f32 %v825
      %v842 = vcvt.s32.f32 %v826
      %v843 = vcvt.s32.f32 %v827
      %v844 = vcvt.s32.f32 %v828
      %v845 = vcvt.s32.f32 %v829
      %v846 = vcvt.s32.f32 %v830
      %847 = vmatprep.subr.mxu0 0.0
      %848 = vmatpush1.msra.mxu0 %v228
      %849 = vmatprep.subr.mxu0 0.0
      %850 = vmatpush1.msra.mxu0 %v229
      %851 = vmatprep.subr.mxu0 0.0
      %852 = vmatpush1.msra.mxu0 %v230
      %853 = vmatprep.subr.mxu0 0.0
      %854 = vmatpush1.msra.mxu0 %v231
      %855 = vmatprep.subr.mxu0 0.0
      %856 = vmatpush1.msra.mxu0 %v232
      %857 = vmatprep.subr.mxu0 0.0
      %858 = vmatpush1.msra.mxu0 %v233
      %859 = vmatprep.subr.mxu0 0.0
      %860 = vmatpush1.msra.mxu0 %v234
      %861 = vmatprep.subr.mxu0 0.0
      %862 = vmatpush1.msra.mxu0 %v235
      %863 = vmatprep.subr.mxu0 0.0
      %864 = vmatpush1.msra.mxu0 %v236
      %865 = vmatprep.subr.mxu0 0.0
      %866 = vmatpush1.msra.mxu0 %v237
      %867 = vmatprep.subr.mxu0 0.0
      %868 = vmatpush1.msra.mxu0 %v238
      %869 = vmatprep.subr.mxu0 0.0
      %870 = vmatpush1.msra.mxu0 %v239
      %871 = vmatprep.subr.mxu0 0.0
      %872 = vmatpush1.msra.mxu0 %v240
      %873 = vmatprep.subr.mxu0 0.0
      %874 = vmatpush1.msra.mxu0 %v241
      %875 = vmatprep.subr.mxu0 0.0
      %876 = vmatpush1.msra.mxu0 %v242
      %877 = vmatprep.subr.mxu0 0.0
      %878 = vmatpush1.msra.mxu0 %v243
      %879 = vmatprep.subr.mxu0 0.0
      %880 = vmatpush1.msra.mxu0 0.0
      %881 = vmatprep.subr.mxu0 0.0
      %882 = vmatpush1.msra.mxu0 0.0
      %883 = vmatprep.subr.mxu0 0.0
      %884 = vmatpush1.msra.mxu0 0.0
      %885 = vmatprep.subr.mxu0 0.0
      %886 = vmatpush1.msra.mxu0 0.0
      %887 = vmatprep.subr.mxu0 0.0
      %888 = vmatpush1.msra.mxu0 0.0
      %889 = vmatprep.subr.mxu0 0.0
      %890 = vmatpush1.msra.mxu0 0.0
      %891 = vmatprep.subr.mxu0 0.0
      %892 = vmatpush1.msra.mxu0 0.0
      %893 = vmatprep.subr.mxu0 0.0
      %894 = vmatpush1.msra.mxu0 0.0
      %895 = vmatprep.subr.mxu0 0.0
      %896 = vmatpush1.msra.mxu0 0.0
      %897 = vmatprep.subr.mxu0 0.0
      %898 = vmatpush1.msra.mxu0 0.0
      %899 = vmatprep.subr.mxu0 0.0
      %900 = vmatpush1.msra.mxu0 0.0
      %901 = vmatprep.subr.mxu0 0.0
      %902 = vmatpush1.msra.mxu0 0.0
      %903 = vmatprep.subr.mxu0 0.0
      %904 = vmatpush1.msra.mxu0 0.0
      %905 = vmatprep.subr.mxu0 0.0
      %906 = vmatpush1.msra.mxu0 0.0
      %907 = vmatprep.subr.mxu0 0.0
      %908 = vmatpush1.msra.mxu0 0.0
      %909 = vmatprep.subr.mxu0 0.0
      %910 = vmatpush1.msra.mxu0 0.0
      %911 = vmatprep.mubr.f32.mxu0 0.0
      %912 = vmatmul.mubr.f32.gmra.mrb[0].mxu0 %v831
      %v913 = vpop.f32.mrb[0].mxu0
      %v914 = vadd.f32 0.0, %v913
      %v915 = vpop.f32.mrb[0].mxu0
      %916 = vmatprep.mubr.f32.mxu0 0.0
      %917 = vmatmul.mubr.f32.gmra.mrb[0].mxu0 %v832
      %v918 = vpop.f32.mrb[0].mxu0
      %v919 = vadd.f32 0.0, %v918
      %v920 = vpop.f32.mrb[0].mxu0
      %921 = vmatprep.mubr.f32.mxu0 0.0
      %922 = vmatmul.mubr.f32.gmra.mrb[0].mxu0 %v833
      %v923 = vpop.f32.mrb[0].mxu0
      %v924 = vadd.f32 0.0, %v923
      %v925 = vpop.f32.mrb[0].mxu0
      %926 = vmatprep.mubr.f32.mxu0 0.0
      %927 = vmatmul.mubr.f32.gmra.mrb[0].mxu0 %v834
      %v928 = vpop.f32.mrb[0].mxu0
      %v929 = vadd.f32 0.0, %v928
      %v930 = vpop.f32.mrb[0].mxu0
      %931 = vmatprep.mubr.f32.mxu0 0.0
      %932 = vmatmul.mubr.f32.gmra.mrb[0].mxu0 %v835
      %v933 = vpop.f32.mrb[0].mxu0
      %v934 = vadd.f32 0.0, %v933
      %v935 = vpop.f32.mrb[0].mxu0
      %936 = vmatprep.mubr.f32.mxu0 0.0
      %937 = vmatmul.mubr.f32.gmra.mrb[0].mxu0 %v836
      %v938 = vpop.f32.mrb[0].mxu0
      %v939 = vadd.f32 0.0, %v938
      %v940 = vpop.f32.mrb[0].mxu0
      %941 = vmatprep.mubr.f32.mxu0 0.0
      %942 = vmatmul.mubr.f32.gmra.mrb[0].mxu0 %v837
      %v943 = vpop.f32.mrb[0].mxu0
      %v944 = vadd.f32 0.0, %v943
      %v945 = vpop.f32.mrb[0].mxu0
      %946 = vmatprep.mubr.f32.mxu0 0.0
      %947 = vmatmul.mubr.f32.gmra.mrb[0].mxu0 %v838
      %v948 = vpop.f32.mrb[0].mxu0
      %v949 = vadd.f32 0.0, %v948
      %v950 = vpop.f32.mrb[0].mxu0
      %951 = vmatprep.mubr.f32.mxu0 0.0
      %952 = vmatmul.mubr.f32.gmra.mrb[0].mxu0 %v839
      %v953 = vpop.f32.mrb[0].mxu0
      %v954 = vadd.f32 0.0, %v953
      %v955 = vpop.f32.mrb[0].mxu0
      %956 = vmatprep.mubr.f32.mxu0 0.0
      %957 = vmatmul.mubr.f32.gmra.mrb[0].mxu0 %v840
      %v958 = vpop.f32.mrb[0].mxu0
      %v959 = vadd.f32 0.0, %v958
      %v960 = vpop.f32.mrb[0].mxu0
      %961 = vmatprep.mubr.f32.mxu0 0.0
      %962 = vmatmul.mubr.f32.gmra.mrb[0].mxu0 %v841
      %v963 = vpop.f32.mrb[0].mxu0
      %v964 = vadd.f32 0.0, %v963
      %v965 = vpop.f32.mrb[0].mxu0
      %966 = vmatprep.mubr.f32.mxu0 0.0
      %967 = vmatmul.mubr.f32.gmra.mrb[0].mxu0 %v842
      %v968 = vpop.f32.mrb[0].mxu0
      %v969 = vadd.f32 0.0, %v968
      %v970 = vpop.f32.mrb[0].mxu0
      %971 = vmatprep.mubr.f32.mxu0 0.0
      %972 = vmatmul.mubr.f32.gmra.mrb[0].mxu0 %v843
      %v973 = vpop.f32.mrb[0].mxu0
      %v974 = vadd.f32 0.0, %v973
      %v975 = vpop.f32.mrb[0].mxu0
      %976 = vmatprep.mubr.f32.mxu0 0.0
      %977 = vmatmul.mubr.f32.gmra.mrb[0].mxu0 %v844
      %v978 = vpop.f32.mrb[0].mxu0
      %v979 = vadd.f32 0.0, %v978
      %v980 = vpop.f32.mrb[0].mxu0
      %981 = vmatprep.mubr.f32.mxu0 0.0
      %982 = vmatmul.mubr.f32.gmra.mrb[0].mxu0 %v845
      %v983 = vpop.f32.mrb[0].mxu0
      %v984 = vadd.f32 0.0, %v983
      %v985 = vpop.f32.mrb[0].mxu0
      %986 = vmatprep.mubr.f32.mxu0 0.0
      %987 = vmatmul.mubr.f32.gmra.mrb[0].mxu0 %v846
      %v988 = vpop.f32.mrb[0].mxu0
      %v989 = vadd.f32 0.0, %v988
      %v990 = vpop.f32.mrb[0].mxu0
      %991 = vdwg.mxu0
      %992 = vst.msk [vmem:[%s206] sm:$0xff] %vm244, %v914
      %993 = vst.msk [vmem:[%s206 + $0x8] sm:$0xff] %vm244, %v919
      %994 = vst.msk [vmem:[%s206 + $0x10] sm:$0xff] %vm244, %v924
      %995 = vst.msk [vmem:[%s206 + $0x18] sm:$0xff] %vm244, %v929
      %996 = vst.msk [vmem:[%s206 + $0x20] sm:$0xff] %vm244, %v934
      %997 = vst.msk [vmem:[%s206 + $0x28] sm:$0xff] %vm244, %v939
      %998 = vst.msk [vmem:[%s206 + $0x30] sm:$0xff] %vm244, %v944
      %999 = vst.msk [vmem:[%s206 + $0x38] sm:$0xff] %vm244, %v949
      %1000 = vst.msk [vmem:[%s206 + $0x40] sm:$0xff] %vm244, %v954
      %1001 = vst.msk [vmem:[%s206 + $0x48] sm:$0xff] %vm244, %v959
      %1002 = vst.msk [vmem:[%s206 + $0x50] sm:$0xff] %vm244, %v964
      %1003 = vst.msk [vmem:[%s206 + $0x58] sm:$0xff] %vm244, %v969
      %1004 = vst.msk [vmem:[%s206 + $0x60] sm:$0xff] %vm244, %v974
      %1005 = vst.msk [vmem:[%s206 + $0x68] sm:$0xff] %vm244, %v979
      %1006 = vst.msk [vmem:[%s206 + $0x70] sm:$0xff] %vm244, %v984
      %1007 = vst.msk [vmem:[%s206 + $0x78] sm:$0xff] %vm244, %v989
      %v1008 = vsub.f32 %v914, %v212
      %v1009 = vsub.f32 %v919, %v213
      %v1010 = vsub.f32 %v924, %v214
      %v1011 = vsub.f32 %v929, %v215
      %v1012 = vsub.f32 %v934, %v216
      %v1013 = vsub.f32 %v939, %v217
      %v1014 = vsub.f32 %v944, %v218
      %v1015 = vsub.f32 %v949, %v219
      %v1016 = vsub.f32 %v954, %v220
      %v1017 = vsub.f32 %v959, %v221
      %v1018 = vsub.f32 %v964, %v222
      %v1019 = vsub.f32 %v969, %v223
      %v1020 = vsub.f32 %v974, %v224
      %v1021 = vsub.f32 %v979, %v225
      %v1022 = vsub.f32 %v984, %v226
      %v1023 = vsub.f32 %v989, %v227
      %v1024 = vmul.f32 %v1008, %v1008
      %v1025 = vmul.f32 %v1009, %v1009
      %v1026 = vmul.f32 %v1010, %v1010
      %v1027 = vmul.f32 %v1011, %v1011
      %v1028 = vmul.f32 %v1012, %v1012
      %v1029 = vmul.f32 %v1013, %v1013
      %v1030 = vmul.f32 %v1014, %v1014
      %v1031 = vmul.f32 %v1015, %v1015
      %v1032 = vmul.f32 %v1016, %v1016
      %v1033 = vmul.f32 %v1017, %v1017
      %v1034 = vmul.f32 %v1018, %v1018
      %v1035 = vmul.f32 %v1019, %v1019
      %v1036 = vmul.f32 %v1020, %v1020
      %v1037 = vmul.f32 %v1021, %v1021
      %v1038 = vmul.f32 %v1022, %v1022
      %v1039 = vmul.f32 %v1023, %v1023
      %v1040 = vsel %vm244, %v1024, 0.0
      %v1041 = vsel %vm244, %v1025, 0.0
      %v1042 = vadd.f32 %v1040, %v1041
      %v1043 = vsel %vm244, %v1026, 0.0
      %v1044 = vadd.f32 %v1042, %v1043
      %v1045 = vsel %vm244, %v1027, 0.0
      %v1046 = vadd.f32 %v1044, %v1045
      %v1047 = vsel %vm244, %v1028, 0.0
      %v1048 = vadd.f32 %v1046, %v1047
      %v1049 = vsel %vm244, %v1029, 0.0
      %v1050 = vadd.f32 %v1048, %v1049
      %v1051 = vsel %vm244, %v1030, 0.0
      %v1052 = vadd.f32 %v1050, %v1051
      %v1053 = vsel %vm244, %v1031, 0.0
      %v1054 = vadd.f32 %v1052, %v1053
      %v1055 = vsel %vm244, %v1032, 0.0
      %v1056 = vadd.f32 %v1054, %v1055
      %v1057 = vsel %vm244, %v1033, 0.0
      %v1058 = vadd.f32 %v1056, %v1057
      %v1059 = vsel %vm244, %v1034, 0.0
      %v1060 = vadd.f32 %v1058, %v1059
      %v1061 = vsel %vm244, %v1035, 0.0
      %v1062 = vadd.f32 %v1060, %v1061
      %v1063 = vsel %vm244, %v1036, 0.0
      %v1064 = vadd.f32 %v1062, %v1063
      %v1065 = vsel %vm244, %v1037, 0.0
      %v1066 = vadd.f32 %v1064, %v1065
      %v1067 = vsel %vm244, %v1038, 0.0
      %v1068 = vadd.f32 %v1066, %v1067
      %v1069 = vsel %vm244, %v1039, 0.0
      %v1070 = vadd.f32 %v1068, %v1069
      %1071 = vst.msk [vmem:[%s211] sm:$0xff] %vm244, %v1070
      %s1072 = smul.u32 16, %s16
      %p1073 = scmp.lt.s32.totalorder %s1072, 63
      %s1074 = scalar_select %p1073, %s1072, 63
      %s1075 = smul.addr %s1074, 8
      %s1076 = scalar_lea.vmem %s3, %s1075
      %p1077 = scmp.lt.s32.totalorder %s16, 3
      %s1078 = scalar_select %p1077, %s16, 3
      %s1079 = smul.addr %s1078, 8
      %s1080 = scalar_lea.vmem %s4, %s1079
      // Predicated region
      $region33: #{tpu_custom_call.1} parent=31 // pred_check
        %p1081 = pneg %p102
      $region34: #{tpu_custom_call.1} parent=31 // pred_check_branch
        %1083 = sbr.rel (%p1081) target = $region36
      $region35: #{tpu_custom_call.1} parent=31 // pred_region
        %s1084 = smul.u32 16, %s16
      $region36: #{tpu_custom_call.1} parent=31 // pred_fallthru
        _
      // Predicated region
      $region37: #{tpu_custom_call.1} parent=31 // pred_check
        %p1085 = pneg %p128
      $region38: #{tpu_custom_call.1} parent=31 // pred_check_branch
        %1087 = sbr.rel (%p1085) target = $region40
      $region39: #{tpu_custom_call.1} parent=31 // pred_region
        _
      $region40: #{tpu_custom_call.1} parent=31 // pred_fallthru
        _
    $region32: #{tpu_custom_call.1} parent=5 // pred_fallthru
      _
    %p1088 = scmp.le.s32.totalorder 2, %s11
    // Predicated region
    $region41: #{tpu_custom_call.1} parent=5 // pred_check
      %p1089 = pneg %p1088
    $region42: #{tpu_custom_call.1} parent=5 // pred_check_branch
      %1091 = sbr.rel (%p1089) target = $region44
    $region43: #{tpu_custom_call.1} parent=5 // pred_region
      %s1092 = ssub.s32 %s11, 2
      // Predicated region
      $region45: #{tpu_custom_call.1} parent=43 // pred_check
        %p1093 = pneg %p108
      $region46: #{tpu_custom_call.1} parent=43 // pred_check_branch
        %1095 = sbr.rel (%p1093) target = $region48
      $region47: #{tpu_custom_call.1} parent=43 // pred_region
        %s1096 = smul.u32 16, %s17
        %p1097 = scmp.lt.s32.totalorder %s1096, 63
        %s1098 = scalar_select %p1097, %s1096, 63
        %s1099 = smul.addr %s1098, 8
        %s1100 = scalar_lea.vmem %s3, %s1099
      $region48: #{tpu_custom_call.1} parent=43 // pred_fallthru
        _
      // Predicated region
      $region49: #{tpu_custom_call.1} parent=43 // pred_check
        %p1101 = pneg %p134
      $region50: #{tpu_custom_call.1} parent=43 // pred_check_branch
        %1103 = sbr.rel (%p1101) target = $region52
      $region51: #{tpu_custom_call.1} parent=43 // pred_region
        %p1104 = scmp.lt.s32.totalorder %s17, 3
        %s1105 = scalar_select %p1104, %s17, 3
        %s1106 = smul.addr %s1105, 8
        %s1107 = scalar_lea.vmem %s4, %s1106
      $region52: #{tpu_custom_call.1} parent=43 // pred_fallthru
        _
    $region44: #{tpu_custom_call.1} parent=5 // pred_fallthru
      _
  $region6: #{tpu_custom_call.1} parent=0 // loop_footer
    %s15 = sadd.s32 1, %s11
  $region7: #{tpu_custom_call.1} parent=0 // loop_footer_branch
    %10 = sbr.rel target = $region3
  $region8: #{tpu_custom_call.1} parent=0 // loop_exit
    _

</llo_original>
